<compile_context>
chip_gen: v7x
topology: tpu7x:2x2x1
jax: 0.10.0
libtpu: 0.0.40
codegen_flags: <defaults>
</compile_context>

<pallas_src>
import functools

import jax
import jax.numpy as jnp
from jax.experimental import pallas as pl
from jax.experimental.pallas import tpu as pltpu


def _integral_kernel(x_ref, o_ref, *, K: int):
    """x_ref: (tn, 4*K) logits tile; o_ref: (tn, 4) expected offsets."""
    C = 4 * K
    x = x_ref[...].astype(jnp.float32)                        # (tn, 4K)

    # Row-wise max (shared by the 4 segments) + clamped, lane-dense exp.
    m = jnp.max(x, axis=-1, keepdims=True)                    # (tn, 1)
    e = jnp.exp(jnp.maximum(x - m, -80.0))                    # (tn, 4K)

    # (4K, 8) reduction matrix, built in-kernel (no extra DMA stream):
    #   column k   (k < 4): (j in segment k) * (j mod K)  -> weighted sums
    #   column 4+k        : (j in segment k)              -> normalizers
    j = jax.lax.broadcasted_iota(jnp.int32, (C, 8), 0)
    c = jax.lax.broadcasted_iota(jnp.int32, (C, 8), 1)
    seg = ((j >= K).astype(jnp.int32)
           + (j >= 2 * K).astype(jnp.int32)
           + (j >= 3 * K).astype(jnp.int32))                  # segment id 0..3
    idx = (j - K * seg).astype(jnp.float32)                   # bin index 0..K-1
    proj_mat = (jnp.where(seg == c, idx, 0.0)                 # cols 0..3
                + jnp.where(seg == c - 4, 1.0, 0.0))          # cols 4..7

    y = jnp.dot(e, proj_mat,
                preferred_element_type=jnp.float32,
                precision=jax.lax.Precision.HIGHEST)          # (tn, 8) on MXU
    w = y[:, 0:4]                                             # sum(p_i * i) numerators
    s = y[:, 4:8]                                             # softmax denominators
    o_ref[...] = (w * pl.reciprocal(s, approx=False)).astype(o_ref.dtype)


@functools.partial(jax.jit, static_argnames=("reg_max", "block_rows"))
def integral(x, reg_max=16, block_rows=8192):
    """Pallas implementation of Integral.forward.

    Args:
      x: (N, 4*(reg_max+1)) regression logits.
    Returns:
      (N, 4) expected distances (distribution expectations per side).
    """
    K = reg_max + 1
    N, C = x.shape
    assert C == 4 * K, f"expected last dim {4 * K}, got {C}"

    # Row tile: as large as possible (few grid steps) while fitting comfortably
    # in VMEM on v5e/v6e/v7x.  Multiple of 8 so a ragged last block is legal,
    # or exactly N when the whole problem fits in a single block.
    block_rows = max(8, (block_rows // 8) * 8)
    tn = N if N <= block_rows else block_rows
    grid = (pl.cdiv(N, tn),)

    return pl.pallas_call(
        functools.partial(_integral_kernel, K=K),
        out_shape=jax.ShapeDtypeStruct((N, 4), x.dtype),
        grid=grid,
        in_specs=[pl.BlockSpec((tn, C), lambda i: (i, 0))],
        out_specs=pl.BlockSpec((tn, 4), lambda i: (i, 0)),
        compiler_params=pltpu.CompilerParams(
            dimension_semantics=("parallel",),
            vmem_limit_bytes=48 * 1024 * 1024,
        ),
    )(x)


def integral_ref(x, reg_max=16):
    """Pure-JAX reference (mirrors the PyTorch code)."""
    K = reg_max + 1
    proj = jnp.linspace(0.0, float(reg_max), K, dtype=jnp.float32)
    p = jax.nn.softmax(x.reshape(-1, K).astype(jnp.float32), axis=1)
    return (p @ proj).reshape(-1, 4).astype(x.dtype)


if __name__ == "__main__":
    reg_max = 16

    # Case 1: tiny input, single block.
    N1 = 8
    x1 = jax.random.normal(jax.random.PRNGKey(0),
                           (N1, 4 * (reg_max + 1)), dtype=jnp.float32)
    out1 = integral(x1, reg_max=reg_max)
    jax.block_until_ready(out1)
    ref1 = integral_ref(x1, reg_max=reg_max)
    assert out1.shape == (N1, 4), out1.shape
    assert jnp.allclose(out1, ref1, atol=1e-3, rtol=1e-3), (
        f"max abs err = {float(jnp.max(jnp.abs(out1 - ref1)))}")

    # Case 2: non-multiple-of-8 row count with a multi-step grid and a ragged
    # last block (exercises the masked-tail path used for large N).
    N2 = 37
    x2 = jax.random.normal(jax.random.PRNGKey(1),
                           (N2, 4 * (reg_max + 1)), dtype=jnp.float32)
    out2 = integral(x2, reg_max=reg_max, block_rows=16)
    jax.block_until_ready(out2)
    ref2 = integral_ref(x2, reg_max=reg_max)
    assert out2.shape == (N2, 4), out2.shape
    assert jnp.allclose(out2, ref2, atol=1e-3, rtol=1e-3), (
        f"max abs err = {float(jnp.max(jnp.abs(out2 - ref2)))}")

    print("KERNEL_OK")
</pallas_src>

<mosaic_0001>
module attributes {stable_mosaic.version = 11 : i64} {
  func.func @_integral_kernel(%arg0: i32, %arg1: memref<8x68xf32, #tpu.memory_space<vmem>>, %arg2: memref<8x4xf32, #tpu.memory_space<vmem>>) attributes {dimension_semantics = [#tpu.dimension_semantics<parallel>], iteration_bounds = array<i64: 1>, scalar_prefetch = 0 : i64, scratch_operands = 0 : i64, tpu.core_type = #tpu.core_type<tc>, window_params = [{transform_indices = @transform_0, window_bounds = array<i64: 8, 68>}, {transform_indices = @transform_1, window_bounds = array<i64: 8, 4>}]} {
    %c0 = arith.constant 0 : index
    %c0_0 = arith.constant 0 : index
    %0 = vector.load %arg1[%c0, %c0_0] : memref<8x68xf32, #tpu.memory_space<vmem>>, vector<8x68xf32>
    %cst = arith.constant dense<0xFF800000> : vector<8xf32>
    %1 = vector.multi_reduction <maximumf>, %0, %cst [1] : vector<8x68xf32> to vector<8xf32>
    %2 = vector.shape_cast %1 : vector<8xf32> to vector<8x1xf32>
    %3 = vector.broadcast %2 : vector<8x1xf32> to vector<8x68xf32>
    %4 = arith.subf %0, %3 : vector<8x68xf32>
    %cst_1 = arith.constant -8.000000e+01 : f32
    %5 = vector.broadcast %cst_1 : f32 to vector<8x68xf32>
    %6 = arith.maximumf %4, %5 : vector<8x68xf32>
    %7 = math.exp %6 : vector<8x68xf32>
    %8 = tpu.iota {dimensions = array<i32: 0>} : vector<68x8xi32>
    %9 = tpu.iota {dimensions = array<i32: 1>} : vector<68x8xi32>
    %c17_i32 = arith.constant 17 : i32
    %10 = vector.broadcast %c17_i32 : i32 to vector<68x8xi32>
    %11 = arith.cmpi sge, %8, %10 : vector<68x8xi32>
    %12 = arith.extui %11 : vector<68x8xi1> to vector<68x8xi32>
    %c34_i32 = arith.constant 34 : i32
    %13 = vector.broadcast %c34_i32 : i32 to vector<68x8xi32>
    %14 = arith.cmpi sge, %8, %13 : vector<68x8xi32>
    %15 = arith.extui %14 : vector<68x8xi1> to vector<68x8xi32>
    %16 = arith.addi %12, %15 : vector<68x8xi32>
    %c51_i32 = arith.constant 51 : i32
    %17 = vector.broadcast %c51_i32 : i32 to vector<68x8xi32>
    %18 = arith.cmpi sge, %8, %17 : vector<68x8xi32>
    %19 = arith.extui %18 : vector<68x8xi1> to vector<68x8xi32>
    %20 = arith.addi %16, %19 : vector<68x8xi32>
    %c17_i32_2 = arith.constant 17 : i32
    %21 = vector.broadcast %c17_i32_2 : i32 to vector<68x8xi32>
    %22 = arith.muli %21, %20 : vector<68x8xi32>
    %23 = arith.subi %8, %22 : vector<68x8xi32>
    %24 = arith.sitofp %23 : vector<68x8xi32> to vector<68x8xf32>
    %25 = arith.cmpi eq, %20, %9 : vector<68x8xi32>
    %cst_3 = arith.constant 0.000000e+00 : f32
    %26 = vector.broadcast %cst_3 : f32 to vector<68x8xf32>
    %27 = arith.select %25, %24, %26 : vector<68x8xi1>, vector<68x8xf32>
    %c4_i32 = arith.constant 4 : i32
    %28 = vector.broadcast %c4_i32 : i32 to vector<68x8xi32>
    %29 = arith.subi %9, %28 : vector<68x8xi32>
    %30 = arith.cmpi eq, %20, %29 : vector<68x8xi32>
    %cst_4 = arith.constant 1.000000e+00 : f32
    %cst_5 = arith.constant 0.000000e+00 : f32
    %31 = vector.broadcast %cst_4 : f32 to vector<68x8xf32>
    %32 = vector.broadcast %cst_5 : f32 to vector<68x8xf32>
    %33 = arith.select %30, %31, %32 : vector<68x8xi1>, vector<68x8xf32>
    %34 = arith.addf %27, %33 : vector<68x8xf32>
    %cst_6 = arith.constant dense<0.000000e+00> : vector<8x8xf32>
    %35 = tpu.matmul %7, %34, %cst_6 {dimension_numbers = #tpu.dot_dimension_numbers<[1], [0], [0], [1], [0, 0, 1, 1], [], []>, precision = #tpu.contract_precision<fp32>} : vector<8x68xf32>, vector<68x8xf32>, vector<8x8xf32> -> vector<8x8xf32>
    %36 = vector.extract_strided_slice %35 {offsets = [0, 0], sizes = [8, 4], strides = [1, 1]} : vector<8x8xf32> to vector<8x4xf32>
    %37 = vector.extract_strided_slice %35 {offsets = [0, 4], sizes = [8, 4], strides = [1, 1]} : vector<8x8xf32> to vector<8x4xf32>
    %38 = tpu.reciprocal %37 : vector<8x4xf32> -> vector<8x4xf32>
    %39 = arith.mulf %36, %38 : vector<8x4xf32>
    %c0_7 = arith.constant 0 : index
    %c0_8 = arith.constant 0 : index
    %40 = vector.load %arg2[%c0_7, %c0_8] : memref<8x4xf32, #tpu.memory_space<vmem>>, vector<8x4xf32>
    tpu.vector_store %arg2[%c0_7, %c0_8], %39 {strides = array<i32>} : memref<8x4xf32, #tpu.memory_space<vmem>>, vector<8x4xf32>,
    return
  }
  func.func @transform_0(%arg0: i32) -> (i32, i32) {
    %c0_i32 = arith.constant 0 : i32
    %c0_i32_0 = arith.constant 0 : i32
    return %arg0, %c0_i32 : i32, i32
  }
  func.func @transform_1(%arg0: i32) -> (i32, i32) {
    %c0_i32 = arith.constant 0 : i32
    %c0_i32_0 = arith.constant 0 : i32
    return %arg0, %c0_i32 : i32, i32
  }
}

</mosaic_0001>

<llo_original>
// kernel: integral.1
$region0: #{integral.1}
  #allocation0 [shape = 'u32[]', space=smem, size = 0x4, offset = 0x4, fixed_abs, tag = 'smem constant byte address 0x4 - core index']
  #allocation1 [shape = 'u32[144,128]{1,0:T(1,128)}', space=vmem, size = 0x12000, scoped, tag = 'internal scratch']
  %s0 = inlined_call_operand.hbm [shape: f32[8,68], index: 0, kind: input, shape index: {}]
  %s1 = inlined_call_operand.vmem [shape: f32[8,4], index: 1, kind: output, shape index: {}]
  %s2 = sld [smem:[#allocation0]]
  $region18: #{integral.1} parent=0
    _
  %s4 = ssub.s32 1, %s2
  %s5 = scalar_select 0, %s4, %s2
  $region1: #{integral.1} parent=0
    #allocation2 [shape = 'u8[4096]{0}', space=vmem, size = 0x1000, scoped, tag = 'input window, operand 0, single buffered']
    #allocation3 [shape = 's32[1]{0}', space=sflag, size = 0x4, scoped, tag = 'scoped memory for integral.1']
    %6 = vsyncpa [#allocation3], 0
    // Predicated region
    $region2: #{integral.1} parent=1 // pred_check
      _
    $region3: #{integral.1} parent=1 // pred_check_branch
      %8 = sbr.rel (0) target = $region5
    $region4: #{integral.1} parent=1 // pred_region
      %s10 = ssub.s32 128, 128
      %11 = vsyncadd [#allocation3], %s10
      %s13 = sshll.u32 [#allocation2], 4
      %s14 = int_to_ptr.vmem [resolvable:$true] %s13
      %16 = dma.hbm_to_vmem [thread:$0]  %s0, 128, %s14, [#allocation3]
    $region5: #{integral.1} parent=1 // pred_fallthru
      _
    // Predicated region
    $region6: #{integral.1} parent=1 // pred_check
      _
    $region7: #{integral.1} parent=1 // pred_check_branch
      %18 = sbr.rel (0) target = $region9
    $region8: #{integral.1} parent=1 // pred_region
      %19 = dma.done [#allocation3], 128
    $region9: #{integral.1} parent=1 // pred_fallthru
      _
    %v20 = vld [vmem:[#allocation2] sm:$0xff]
    %vm21 = vcmask 556032
    %v22 = vsel %vm21, %v20, -inf
    %23 = vmax.xlane.f32.xlu0 %v22
    %v24 = vpop.xlane.xlu0 %23
    %v25 = vsub.f32 %v20, %v24
    %v26 = vmax.f32 %v25, -80.0
    %v27 = vmul.f32 %v26, 1.442695
    %v28 = vpow.pop %v27
    %v29 = vlaneseq
    %v30 = vshrl.u32 %v29, 7
    %v31 = vadd.s32 %v30, 8
    %v32 = vadd.s32 %v30, 16
    %v33 = vadd.s32 %v30, 24
    %v34 = vadd.s32 %v30, 32
    %v35 = vadd.s32 %v30, 40
    %v36 = vadd.s32 %v30, 48
    %v37 = vadd.s32 %v30, 56
    %v38 = vadd.s32 %v30, 64
    %v39 = vlaneseq
    %v40 = vand.u32 %v39, 127
    %vm41 = vcmp.ge.s32.totalorder %v30, 17
    %vm42 = vcmp.ge.s32.totalorder %v31, 17
    %vm43 = vcmp.ge.s32.totalorder %v32, 17
    %vm44 = vcmp.ge.s32.totalorder %v33, 17
    %vm45 = vcmp.ge.s32.totalorder %v34, 17
    %vm46 = vcmp.ge.s32.totalorder %v35, 17
    %vm47 = vcmp.ge.s32.totalorder %v36, 17
    %vm48 = vcmp.ge.s32.totalorder %v37, 17
    %vm49 = vcmp.ge.s32.totalorder %v38, 17
    %v50 = vsel %vm41, 1, 0
    %v51 = vsel %vm42, 1, 0
    %v52 = vsel %vm43, 1, 0
    %v53 = vsel %vm44, 1, 0
    %v54 = vsel %vm45, 1, 0
    %v55 = vsel %vm46, 1, 0
    %v56 = vsel %vm47, 1, 0
    %v57 = vsel %vm48, 1, 0
    %v58 = vsel %vm49, 1, 0
    %vm59 = vcmp.ge.s32.totalorder %v30, 34
    %vm60 = vcmp.ge.s32.totalorder %v31, 34
    %vm61 = vcmp.ge.s32.totalorder %v32, 34
    %vm62 = vcmp.ge.s32.totalorder %v33, 34
    %vm63 = vcmp.ge.s32.totalorder %v34, 34
    %vm64 = vcmp.ge.s32.totalorder %v35, 34
    %vm65 = vcmp.ge.s32.totalorder %v36, 34
    %vm66 = vcmp.ge.s32.totalorder %v37, 34
    %vm67 = vcmp.ge.s32.totalorder %v38, 34
    %v68 = vsel %vm59, 1, 0
    %v69 = vsel %vm60, 1, 0
    %v70 = vsel %vm61, 1, 0
    %v71 = vsel %vm62, 1, 0
    %v72 = vsel %vm63, 1, 0
    %v73 = vsel %vm64, 1, 0
    %v74 = vsel %vm65, 1, 0
    %v75 = vsel %vm66, 1, 0
    %v76 = vsel %vm67, 1, 0
    %v77 = vadd.s32 %v50, %v68
    %v78 = vadd.s32 %v51, %v69
    %v79 = vadd.s32 %v52, %v70
    %v80 = vadd.s32 %v53, %v71
    %v81 = vadd.s32 %v54, %v72
    %v82 = vadd.s32 %v55, %v73
    %v83 = vadd.s32 %v56, %v74
    %v84 = vadd.s32 %v57, %v75
    %v85 = vadd.s32 %v58, %v76
    %vm86 = vcmp.ge.s32.totalorder %v30, 51
    %vm87 = vcmp.ge.s32.totalorder %v31, 51
    %vm88 = vcmp.ge.s32.totalorder %v32, 51
    %vm89 = vcmp.ge.s32.totalorder %v33, 51
    %vm90 = vcmp.ge.s32.totalorder %v34, 51
    %vm91 = vcmp.ge.s32.totalorder %v35, 51
    %vm92 = vcmp.ge.s32.totalorder %v36, 51
    %vm93 = vcmp.ge.s32.totalorder %v37, 51
    %vm94 = vcmp.ge.s32.totalorder %v38, 51
    %v95 = vsel %vm86, 1, 0
    %v96 = vsel %vm87, 1, 0
    %v97 = vsel %vm88, 1, 0
    %v98 = vsel %vm89, 1, 0
    %v99 = vsel %vm90, 1, 0
    %v100 = vsel %vm91, 1, 0
    %v101 = vsel %vm92, 1, 0
    %v102 = vsel %vm93, 1, 0
    %v103 = vsel %vm94, 1, 0
    %v104 = vadd.s32 %v77, %v95
    %v105 = vadd.s32 %v78, %v96
    %v106 = vadd.s32 %v79, %v97
    %v107 = vadd.s32 %v80, %v98
    %v108 = vadd.s32 %v81, %v99
    %v109 = vadd.s32 %v82, %v100
    %v110 = vadd.s32 %v83, %v101
    %v111 = vadd.s32 %v84, %v102
    %v112 = vadd.s32 %v85, %v103
    %v113 = vmul.u32 %v104, 17
    %v114 = vmul.u32 %v105, 17
    %v115 = vmul.u32 %v106, 17
    %v116 = vmul.u32 %v107, 17
    %v117 = vmul.u32 %v108, 17
    %v118 = vmul.u32 %v109, 17
    %v119 = vmul.u32 %v110, 17
    %v120 = vmul.u32 %v111, 17
    %v121 = vmul.u32 %v112, 17
    %v122 = vsub.s32 %v30, %v113
    %v123 = vsub.s32 %v31, %v114
    %v124 = vsub.s32 %v32, %v115
    %v125 = vsub.s32 %v33, %v116
    %v126 = vsub.s32 %v34, %v117
    %v127 = vsub.s32 %v35, %v118
    %v128 = vsub.s32 %v36, %v119
    %v129 = vsub.s32 %v37, %v120
    %v130 = vsub.s32 %v38, %v121
    %v131 = vcvt.s32.f32 %v122
    %v132 = vcvt.s32.f32 %v123
    %v133 = vcvt.s32.f32 %v124
    %v134 = vcvt.s32.f32 %v125
    %v135 = vcvt.s32.f32 %v126
    %v136 = vcvt.s32.f32 %v127
    %v137 = vcvt.s32.f32 %v128
    %v138 = vcvt.s32.f32 %v129
    %v139 = vcvt.s32.f32 %v130
    %vm140 = vcmp.eq.s32.totalorder %v104, %v40
    %vm141 = vcmp.eq.s32.totalorder %v105, %v40
    %vm142 = vcmp.eq.s32.totalorder %v106, %v40
    %vm143 = vcmp.eq.s32.totalorder %v107, %v40
    %vm144 = vcmp.eq.s32.totalorder %v108, %v40
    %vm145 = vcmp.eq.s32.totalorder %v109, %v40
    %vm146 = vcmp.eq.s32.totalorder %v110, %v40
    %vm147 = vcmp.eq.s32.totalorder %v111, %v40
    %vm148 = vcmp.eq.s32.totalorder %v112, %v40
    %v149 = vsel %vm140, %v131, 0.0
    %v150 = vsel %vm141, %v132, 0.0
    %v151 = vsel %vm142, %v133, 0.0
    %v152 = vsel %vm143, %v134, 0.0
    %v153 = vsel %vm144, %v135, 0.0
    %v154 = vsel %vm145, %v136, 0.0
    %v155 = vsel %vm146, %v137, 0.0
    %v156 = vsel %vm147, %v138, 0.0
    %v157 = vsel %vm148, %v139, 0.0
    %v158 = vsub.s32 %v40, 4
    %vm159 = vcmp.eq.s32.totalorder %v104, %v158
    %vm160 = vcmp.eq.s32.totalorder %v105, %v158
    %vm161 = vcmp.eq.s32.totalorder %v106, %v158
    %vm162 = vcmp.eq.s32.totalorder %v107, %v158
    %vm163 = vcmp.eq.s32.totalorder %v108, %v158
    %vm164 = vcmp.eq.s32.totalorder %v109, %v158
    %vm165 = vcmp.eq.s32.totalorder %v110, %v158
    %vm166 = vcmp.eq.s32.totalorder %v111, %v158
    %vm167 = vcmp.eq.s32.totalorder %v112, %v158
    %v168 = vsel %vm159, 1.0, 0.0
    %v169 = vsel %vm160, 1.0, 0.0
    %v170 = vsel %vm161, 1.0, 0.0
    %v171 = vsel %vm162, 1.0, 0.0
    %v172 = vsel %vm163, 1.0, 0.0
    %v173 = vsel %vm164, 1.0, 0.0
    %v174 = vsel %vm165, 1.0, 0.0
    %v175 = vsel %vm166, 1.0, 0.0
    %v176 = vsel %vm167, 1.0, 0.0
    %v177 = vadd.f32 %v149, %v168
    %v178 = vadd.f32 %v150, %v169
    %v179 = vadd.f32 %v151, %v170
    %v180 = vadd.f32 %v152, %v171
    %v181 = vadd.f32 %v153, %v172
    %v182 = vadd.f32 %v154, %v173
    %v183 = vadd.f32 %v155, %v174
    %v184 = vadd.f32 %v156, %v175
    %v185 = vadd.f32 %v157, %v176
    %v187 = vsel %vm21, %v28, 0
    %vm189 = vcmask 1043456
    %v191 = vsel %vm189, %v185, 0
    %193 = vmatprep.subr.mxu0 0.0
    %v194 = vand.u32 %v177, 4294901760
    %195 = vmatpush1.msra.mxu0 %v194
    %196 = vmatprep.subr.mxu0 0.0
    %v197 = vand.u32 %v178, 4294901760
    %198 = vmatpush1.msra.mxu0 %v197
    %199 = vmatprep.subr.mxu0 0.0
    %v200 = vand.u32 %v179, 4294901760
    %201 = vmatpush1.msra.mxu0 %v200
    %202 = vmatprep.subr.mxu0 0.0
    %v203 = vand.u32 %v180, 4294901760
    %204 = vmatpush1.msra.mxu0 %v203
    %205 = vmatprep.subr.mxu0 0.0
    %v206 = vand.u32 %v181, 4294901760
    %207 = vmatpush1.msra.mxu0 %v206
    %208 = vmatprep.subr.mxu0 0.0
    %v209 = vand.u32 %v182, 4294901760
    %210 = vmatpush1.msra.mxu0 %v209
    %211 = vmatprep.subr.mxu0 0.0
    %v212 = vand.u32 %v183, 4294901760
    %213 = vmatpush1.msra.mxu0 %v212
    %214 = vmatprep.subr.mxu0 0.0
    %v215 = vand.u32 %v184, 4294901760
    %216 = vmatpush1.msra.mxu0 %v215
    %217 = vmatprep.subr.mxu0 0.0
    %v218 = vand.u32 %v191, 4294901760
    %219 = vmatpush1.msra.mxu0 %v218
    %220 = vmatprep.subr.mxu0 0.0
    %221 = vmatpush1.msra.mxu0 0.0
    %222 = vmatprep.subr.mxu0 0.0
    %223 = vmatpush1.msra.mxu0 0.0
    %224 = vmatprep.subr.mxu0 0.0
    %225 = vmatpush1.msra.mxu0 0.0
    %226 = vmatprep.subr.mxu0 0.0
    %227 = vmatpush1.msra.mxu0 0.0
    %228 = vmatprep.subr.mxu0 0.0
    %229 = vmatpush1.msra.mxu0 0.0
    %230 = vmatprep.subr.mxu0 0.0
    %231 = vmatpush1.msra.mxu0 0.0
    %232 = vmatprep.subr.mxu0 0.0
    %233 = vmatpush1.msra.mxu0 0.0
    %234 = vmatprep.subr.mxu0 0.0
    %235 = vmatpush1.msra.mxu0 0.0
    %236 = vmatprep.subr.mxu0 0.0
    %237 = vmatpush1.msra.mxu0 0.0
    %238 = vmatprep.subr.mxu0 0.0
    %239 = vmatpush1.msra.mxu0 0.0
    %240 = vmatprep.subr.mxu0 0.0
    %241 = vmatpush1.msra.mxu0 0.0
    %242 = vmatprep.subr.mxu0 0.0
    %243 = vmatpush1.msra.mxu0 0.0
    %244 = vmatprep.subr.mxu0 0.0
    %245 = vmatpush1.msra.mxu0 0.0
    %246 = vmatprep.subr.mxu0 0.0
    %247 = vmatpush1.msra.mxu0 0.0
    %248 = vmatprep.subr.mxu0 0.0
    %249 = vmatpush1.msra.mxu0 0.0
    %250 = vmatprep.subr.mxu0 0.0
    %251 = vmatpush1.msra.mxu0 0.0
    %252 = vmatprep.subr.mxu0 0.0
    %253 = vmatpush1.msra.mxu0 0.0
    %254 = vmatprep.subr.mxu0 0.0
    %255 = vmatpush1.msra.mxu0 0.0
    %256 = vmatprep.subr.mxu0 0.0
    %257 = vmatpush1.msra.mxu0 0.0
    %258 = vmatprep.subr.mxu0 0.0
    %259 = vmatpush1.msra.mxu0 0.0
    %260 = vmatprep.subr.mxu0 0.0
    %261 = vmatpush1.msra.mxu0 0.0
    %262 = vmatprep.subr.mxu0 0.0
    %263 = vmatpush1.msra.mxu0 0.0
    %264 = vmatprep.subr.mxu0 0.0
    %265 = vmatpush1.msra.mxu0 0.0
    %266 = vmatprep.mubr.f32.mxu0 0.0
    %v267 = vand.u32 %v187, 4294901760
    %v268 = vsub.f32 %v187, %v267
    %v269 = vand.u32 %v268, 4294901760
    %v270 = vsub.f32 %v268, %v269
    %v271 = vand.u32 %v270, 4294901760
    %272 = vmatmul.mubr.f32.gmra.mrb[0].mxu0 %v271
    %v273 = vpop.f32.mrb[0].mxu0
    %v274 = vadd.f32 0.0, %v273
    %v275 = vpop.f32.mrb[0].mxu0
    %276 = vdwg.mxu0
    %277 = vmatprep.subr.mxu0 0.0
    %v278 = vand.u32 %v177, 4294901760
    %v279 = vsub.f32 %v177, %v278
    %v280 = vand.u32 %v279, 4294901760
    %v281 = vsub.f32 %v279, %v280
    %v282 = vand.u32 %v281, 4294901760
    %283 = vmatpush1.msra.mxu0 %v282
    %284 = vmatprep.subr.mxu0 0.0
    %v285 = vand.u32 %v178, 4294901760
    %v286 = vsub.f32 %v178, %v285
    %v287 = vand.u32 %v286, 4294901760
    %v288 = vsub.f32 %v286, %v287
    %v289 = vand.u32 %v288, 4294901760
    %290 = vmatpush1.msra.mxu0 %v289
    %291 = vmatprep.subr.mxu0 0.0
    %v292 = vand.u32 %v179, 4294901760
    %v293 = vsub.f32 %v179, %v292
    %v294 = vand.u32 %v293, 4294901760
    %v295 = vsub.f32 %v293, %v294
    %v296 = vand.u32 %v295, 4294901760
    %297 = vmatpush1.msra.mxu0 %v296
    %298 = vmatprep.subr.mxu0 0.0
    %v299 = vand.u32 %v180, 4294901760
    %v300 = vsub.f32 %v180, %v299
    %v301 = vand.u32 %v300, 4294901760
    %v302 = vsub.f32 %v300, %v301
    %v303 = vand.u32 %v302, 4294901760
    %304 = vmatpush1.msra.mxu0 %v303
    %305 = vmatprep.subr.mxu0 0.0
    %v306 = vand.u32 %v181, 4294901760
    %v307 = vsub.f32 %v181, %v306
    %v308 = vand.u32 %v307, 4294901760
    %v309 = vsub.f32 %v307, %v308
    %v310 = vand.u32 %v309, 4294901760
    %311 = vmatpush1.msra.mxu0 %v310
    %312 = vmatprep.subr.mxu0 0.0
    %v313 = vand.u32 %v182, 4294901760
    %v314 = vsub.f32 %v182, %v313
    %v315 = vand.u32 %v314, 4294901760
    %v316 = vsub.f32 %v314, %v315
    %v317 = vand.u32 %v316, 4294901760
    %318 = vmatpush1.msra.mxu0 %v317
    %319 = vmatprep.subr.mxu0 0.0
    %v320 = vand.u32 %v183, 4294901760
    %v321 = vsub.f32 %v183, %v320
    %v322 = vand.u32 %v321, 4294901760
    %v323 = vsub.f32 %v321, %v322
    %v324 = vand.u32 %v323, 4294901760
    %325 = vmatpush1.msra.mxu0 %v324
    %326 = vmatprep.subr.mxu0 0.0
    %v327 = vand.u32 %v184, 4294901760
    %v328 = vsub.f32 %v184, %v327
    %v329 = vand.u32 %v328, 4294901760
    %v330 = vsub.f32 %v328, %v329
    %v331 = vand.u32 %v330, 4294901760
    %332 = vmatpush1.msra.mxu0 %v331
    %333 = vmatprep.subr.mxu0 0.0
    %v334 = vand.u32 %v191, 4294901760
    %v335 = vsub.f32 %v191, %v334
    %v336 = vand.u32 %v335, 4294901760
    %v337 = vsub.f32 %v335, %v336
    %v338 = vand.u32 %v337, 4294901760
    %339 = vmatpush1.msra.mxu0 %v338
    %340 = vmatprep.subr.mxu0 0.0
    %341 = vmatpush1.msra.mxu0 0.0
    %342 = vmatprep.subr.mxu0 0.0
    %343 = vmatpush1.msra.mxu0 0.0
    %344 = vmatprep.subr.mxu0 0.0
    %345 = vmatpush1.msra.mxu0 0.0
    %346 = vmatprep.subr.mxu0 0.0
    %347 = vmatpush1.msra.mxu0 0.0
    %348 = vmatprep.subr.mxu0 0.0
    %349 = vmatpush1.msra.mxu0 0.0
    %350 = vmatprep.subr.mxu0 0.0
    %351 = vmatpush1.msra.mxu0 0.0
    %352 = vmatprep.subr.mxu0 0.0
    %353 = vmatpush1.msra.mxu0 0.0
    %354 = vmatprep.subr.mxu0 0.0
    %355 = vmatpush1.msra.mxu0 0.0
    %356 = vmatprep.subr.mxu0 0.0
    %357 = vmatpush1.msra.mxu0 0.0
    %358 = vmatprep.subr.mxu0 0.0
    %359 = vmatpush1.msra.mxu0 0.0
    %360 = vmatprep.subr.mxu0 0.0
    %361 = vmatpush1.msra.mxu0 0.0
    %362 = vmatprep.subr.mxu0 0.0
    %363 = vmatpush1.msra.mxu0 0.0
    %364 = vmatprep.subr.mxu0 0.0
    %365 = vmatpush1.msra.mxu0 0.0
    %366 = vmatprep.subr.mxu0 0.0
    %367 = vmatpush1.msra.mxu0 0.0
    %368 = vmatprep.subr.mxu0 0.0
    %369 = vmatpush1.msra.mxu0 0.0
    %370 = vmatprep.subr.mxu0 0.0
    %371 = vmatpush1.msra.mxu0 0.0
    %372 = vmatprep.subr.mxu0 0.0
    %373 = vmatpush1.msra.mxu0 0.0
    %374 = vmatprep.subr.mxu0 0.0
    %375 = vmatpush1.msra.mxu0 0.0
    %376 = vmatprep.subr.mxu0 0.0
    %377 = vmatpush1.msra.mxu0 0.0
    %378 = vmatprep.subr.mxu0 0.0
    %379 = vmatpush1.msra.mxu0 0.0
    %380 = vmatprep.subr.mxu0 0.0
    %381 = vmatpush1.msra.mxu0 0.0
    %382 = vmatprep.subr.mxu0 0.0
    %383 = vmatpush1.msra.mxu0 0.0
    %384 = vmatprep.subr.mxu0 0.0
    %385 = vmatpush1.msra.mxu0 0.0
    %386 = vmatprep.mubr.f32.mxu0 0.0
    %v387 = vand.u32 %v187, 4294901760
    %388 = vmatmul.mubr.f32.gmra.mrb[0].mxu0 %v387
    %v389 = vpop.f32.mrb[0].mxu0
    %v390 = vadd.f32 %v274, %v389
    %v391 = vpop.f32.mrb[0].mxu0
    %392 = vdwg.mxu0
    %393 = vmatprep.subr.mxu0 0.0
    %v394 = vand.u32 %v177, 4294901760
    %v395 = vsub.f32 %v177, %v394
    %396 = vmatpush1.msra.mxu0 %v395
    %397 = vmatprep.subr.mxu0 0.0
    %v398 = vand.u32 %v178, 4294901760
    %v399 = vsub.f32 %v178, %v398
    %400 = vmatpush1.msra.mxu0 %v399
    %401 = vmatprep.subr.mxu0 0.0
    %v402 = vand.u32 %v179, 4294901760
    %v403 = vsub.f32 %v179, %v402
    %404 = vmatpush1.msra.mxu0 %v403
    %405 = vmatprep.subr.mxu0 0.0
    %v406 = vand.u32 %v180, 4294901760
    %v407 = vsub.f32 %v180, %v406
    %408 = vmatpush1.msra.mxu0 %v407
    %409 = vmatprep.subr.mxu0 0.0
    %v410 = vand.u32 %v181, 4294901760
    %v411 = vsub.f32 %v181, %v410
    %412 = vmatpush1.msra.mxu0 %v411
    %413 = vmatprep.subr.mxu0 0.0
    %v414 = vand.u32 %v182, 4294901760
    %v415 = vsub.f32 %v182, %v414
    %416 = vmatpush1.msra.mxu0 %v415
    %417 = vmatprep.subr.mxu0 0.0
    %v418 = vand.u32 %v183, 4294901760
    %v419 = vsub.f32 %v183, %v418
    %420 = vmatpush1.msra.mxu0 %v419
    %421 = vmatprep.subr.mxu0 0.0
    %v422 = vand.u32 %v184, 4294901760
    %v423 = vsub.f32 %v184, %v422
    %424 = vmatpush1.msra.mxu0 %v423
    %425 = vmatprep.subr.mxu0 0.0
    %v426 = vand.u32 %v191, 4294901760
    %v427 = vsub.f32 %v191, %v426
    %428 = vmatpush1.msra.mxu0 %v427
    %429 = vmatprep.subr.mxu0 0.0
    %430 = vmatpush1.msra.mxu0 0.0
    %431 = vmatprep.subr.mxu0 0.0
    %432 = vmatpush1.msra.mxu0 0.0
    %433 = vmatprep.subr.mxu0 0.0
    %434 = vmatpush1.msra.mxu0 0.0
    %435 = vmatprep.subr.mxu0 0.0
    %436 = vmatpush1.msra.mxu0 0.0
    %437 = vmatprep.subr.mxu0 0.0
    %438 = vmatpush1.msra.mxu0 0.0
    %439 = vmatprep.subr.mxu0 0.0
    %440 = vmatpush1.msra.mxu0 0.0
    %441 = vmatprep.subr.mxu0 0.0
    %442 = vmatpush1.msra.mxu0 0.0
    %443 = vmatprep.subr.mxu0 0.0
    %444 = vmatpush1.msra.mxu0 0.0
    %445 = vmatprep.subr.mxu0 0.0
    %446 = vmatpush1.msra.mxu0 0.0
    %447 = vmatprep.subr.mxu0 0.0
    %448 = vmatpush1.msra.mxu0 0.0
    %449 = vmatprep.subr.mxu0 0.0
    %450 = vmatpush1.msra.mxu0 0.0
    %451 = vmatprep.subr.mxu0 0.0
    %452 = vmatpush1.msra.mxu0 0.0
    %453 = vmatprep.subr.mxu0 0.0
    %454 = vmatpush1.msra.mxu0 0.0
    %455 = vmatprep.subr.mxu0 0.0
    %456 = vmatpush1.msra.mxu0 0.0
    %457 = vmatprep.subr.mxu0 0.0
    %458 = vmatpush1.msra.mxu0 0.0
    %459 = vmatprep.subr.mxu0 0.0
    %460 = vmatpush1.msra.mxu0 0.0
    %461 = vmatprep.subr.mxu0 0.0
    %462 = vmatpush1.msra.mxu0 0.0
    %463 = vmatprep.subr.mxu0 0.0
    %464 = vmatpush1.msra.mxu0 0.0
    %465 = vmatprep.subr.mxu0 0.0
    %466 = vmatpush1.msra.mxu0 0.0
    %467 = vmatprep.subr.mxu0 0.0
    %468 = vmatpush1.msra.mxu0 0.0
    %469 = vmatprep.subr.mxu0 0.0
    %470 = vmatpush1.msra.mxu0 0.0
    %471 = vmatprep.subr.mxu0 0.0
    %472 = vmatpush1.msra.mxu0 0.0
    %473 = vmatprep.subr.mxu0 0.0
    %474 = vmatpush1.msra.mxu0 0.0
    %475 = vmatprep.mubr.f32.mxu0 0.0
    %v476 = vand.u32 %v187, 4294901760
    %v477 = vsub.f32 %v187, %v476
    %478 = vmatmul.mubr.f32.gmra.mrb[0].mxu0 %v477
    %v479 = vpop.f32.mrb[0].mxu0
    %v480 = vadd.f32 %v390, %v479
    %v481 = vpop.f32.mrb[0].mxu0
    %482 = vdwg.mxu0
    %483 = vmatprep.subr.mxu0 0.0
    %v484 = vand.u32 %v177, 4294901760
    %485 = vmatpush1.msra.mxu0 %v484
    %486 = vmatprep.subr.mxu0 0.0
    %v487 = vand.u32 %v178, 4294901760
    %488 = vmatpush1.msra.mxu0 %v487
    %489 = vmatprep.subr.mxu0 0.0
    %v490 = vand.u32 %v179, 4294901760
    %491 = vmatpush1.msra.mxu0 %v490
    %492 = vmatprep.subr.mxu0 0.0
    %v493 = vand.u32 %v180, 4294901760
    %494 = vmatpush1.msra.mxu0 %v493
    %495 = vmatprep.subr.mxu0 0.0
    %v496 = vand.u32 %v181, 4294901760
    %497 = vmatpush1.msra.mxu0 %v496
    %498 = vmatprep.subr.mxu0 0.0
    %v499 = vand.u32 %v182, 4294901760
    %500 = vmatpush1.msra.mxu0 %v499
    %501 = vmatprep.subr.mxu0 0.0
    %v502 = vand.u32 %v183, 4294901760
    %503 = vmatpush1.msra.mxu0 %v502
    %504 = vmatprep.subr.mxu0 0.0
    %v505 = vand.u32 %v184, 4294901760
    %506 = vmatpush1.msra.mxu0 %v505
    %507 = vmatprep.subr.mxu0 0.0
    %v508 = vand.u32 %v191, 4294901760
    %509 = vmatpush1.msra.mxu0 %v508
    %510 = vmatprep.subr.mxu0 0.0
    %511 = vmatpush1.msra.mxu0 0.0
    %512 = vmatprep.subr.mxu0 0.0
    %513 = vmatpush1.msra.mxu0 0.0
    %514 = vmatprep.subr.mxu0 0.0
    %515 = vmatpush1.msra.mxu0 0.0
    %516 = vmatprep.subr.mxu0 0.0
    %517 = vmatpush1.msra.mxu0 0.0
    %518 = vmatprep.subr.mxu0 0.0
    %519 = vmatpush1.msra.mxu0 0.0
    %520 = vmatprep.subr.mxu0 0.0
    %521 = vmatpush1.msra.mxu0 0.0
    %522 = vmatprep.subr.mxu0 0.0
    %523 = vmatpush1.msra.mxu0 0.0
    %524 = vmatprep.subr.mxu0 0.0
    %525 = vmatpush1.msra.mxu0 0.0
    %526 = vmatprep.subr.mxu0 0.0
    %527 = vmatpush1.msra.mxu0 0.0
    %528 = vmatprep.subr.mxu0 0.0
    %529 = vmatpush1.msra.mxu0 0.0
    %530 = vmatprep.subr.mxu0 0.0
    %531 = vmatpush1.msra.mxu0 0.0
    %532 = vmatprep.subr.mxu0 0.0
    %533 = vmatpush1.msra.mxu0 0.0
    %534 = vmatprep.subr.mxu0 0.0
    %535 = vmatpush1.msra.mxu0 0.0
    %536 = vmatprep.subr.mxu0 0.0
    %537 = vmatpush1.msra.mxu0 0.0
    %538 = vmatprep.subr.mxu0 0.0
    %539 = vmatpush1.msra.mxu0 0.0
    %540 = vmatprep.subr.mxu0 0.0
    %541 = vmatpush1.msra.mxu0 0.0
    %542 = vmatprep.subr.mxu0 0.0
    %543 = vmatpush1.msra.mxu0 0.0
    %544 = vmatprep.subr.mxu0 0.0
    %545 = vmatpush1.msra.mxu0 0.0
    %546 = vmatprep.subr.mxu0 0.0
    %547 = vmatpush1.msra.mxu0 0.0
    %548 = vmatprep.subr.mxu0 0.0
    %549 = vmatpush1.msra.mxu0 0.0
    %550 = vmatprep.subr.mxu0 0.0
    %551 = vmatpush1.msra.mxu0 0.0
    %552 = vmatprep.subr.mxu0 0.0
    %553 = vmatpush1.msra.mxu0 0.0
    %554 = vmatprep.subr.mxu0 0.0
    %555 = vmatpush1.msra.mxu0 0.0
    %556 = vmatprep.mubr.f32.mxu0 0.0
    %v557 = vand.u32 %v187, 4294901760
    %v558 = vsub.f32 %v187, %v557
    %v559 = vand.u32 %v558, 4294901760
    %560 = vmatmul.mubr.f32.gmra.mrb[0].mxu0 %v559
    %v561 = vpop.f32.mrb[0].mxu0
    %v562 = vadd.f32 %v480, %v561
    %v563 = vpop.f32.mrb[0].mxu0
    %564 = vdwg.mxu0
    %565 = vmatprep.subr.mxu0 0.0
    %v566 = vand.u32 %v177, 4294901760
    %v567 = vsub.f32 %v177, %v566
    %v568 = vand.u32 %v567, 4294901760
    %569 = vmatpush1.msra.mxu0 %v568
    %570 = vmatprep.subr.mxu0 0.0
    %v571 = vand.u32 %v178, 4294901760
    %v572 = vsub.f32 %v178, %v571
    %v573 = vand.u32 %v572, 4294901760
    %574 = vmatpush1.msra.mxu0 %v573
    %575 = vmatprep.subr.mxu0 0.0
    %v576 = vand.u32 %v179, 4294901760
    %v577 = vsub.f32 %v179, %v576
    %v578 = vand.u32 %v577, 4294901760
    %579 = vmatpush1.msra.mxu0 %v578
    %580 = vmatprep.subr.mxu0 0.0
    %v581 = vand.u32 %v180, 4294901760
    %v582 = vsub.f32 %v180, %v581
    %v583 = vand.u32 %v582, 4294901760
    %584 = vmatpush1.msra.mxu0 %v583
    %585 = vmatprep.subr.mxu0 0.0
    %v586 = vand.u32 %v181, 4294901760
    %v587 = vsub.f32 %v181, %v586
    %v588 = vand.u32 %v587, 4294901760
    %589 = vmatpush1.msra.mxu0 %v588
    %590 = vmatprep.subr.mxu0 0.0
    %v591 = vand.u32 %v182, 4294901760
    %v592 = vsub.f32 %v182, %v591
    %v593 = vand.u32 %v592, 4294901760
    %594 = vmatpush1.msra.mxu0 %v593
    %595 = vmatprep.subr.mxu0 0.0
    %v596 = vand.u32 %v183, 4294901760
    %v597 = vsub.f32 %v183, %v596
    %v598 = vand.u32 %v597, 4294901760
    %599 = vmatpush1.msra.mxu0 %v598
    %600 = vmatprep.subr.mxu0 0.0
    %v601 = vand.u32 %v184, 4294901760
    %v602 = vsub.f32 %v184, %v601
    %v603 = vand.u32 %v602, 4294901760
    %604 = vmatpush1.msra.mxu0 %v603
    %605 = vmatprep.subr.mxu0 0.0
    %v606 = vand.u32 %v191, 4294901760
    %v607 = vsub.f32 %v191, %v606
    %v608 = vand.u32 %v607, 4294901760
    %609 = vmatpush1.msra.mxu0 %v608
    %610 = vmatprep.subr.mxu0 0.0
    %611 = vmatpush1.msra.mxu0 0.0
    %612 = vmatprep.subr.mxu0 0.0
    %613 = vmatpush1.msra.mxu0 0.0
    %614 = vmatprep.subr.mxu0 0.0
    %615 = vmatpush1.msra.mxu0 0.0
    %616 = vmatprep.subr.mxu0 0.0
    %617 = vmatpush1.msra.mxu0 0.0
    %618 = vmatprep.subr.mxu0 0.0
    %619 = vmatpush1.msra.mxu0 0.0
    %620 = vmatprep.subr.mxu0 0.0
    %621 = vmatpush1.msra.mxu0 0.0
    %622 = vmatprep.subr.mxu0 0.0
    %623 = vmatpush1.msra.mxu0 0.0
    %624 = vmatprep.subr.mxu0 0.0
    %625 = vmatpush1.msra.mxu0 0.0
    %626 = vmatprep.subr.mxu0 0.0
    %627 = vmatpush1.msra.mxu0 0.0
    %628 = vmatprep.subr.mxu0 0.0
    %629 = vmatpush1.msra.mxu0 0.0
    %630 = vmatprep.subr.mxu0 0.0
    %631 = vmatpush1.msra.mxu0 0.0
    %632 = vmatprep.subr.mxu0 0.0
    %633 = vmatpush1.msra.mxu0 0.0
    %634 = vmatprep.subr.mxu0 0.0
    %635 = vmatpush1.msra.mxu0 0.0
    %636 = vmatprep.subr.mxu0 0.0
    %637 = vmatpush1.msra.mxu0 0.0
    %638 = vmatprep.subr.mxu0 0.0
    %639 = vmatpush1.msra.mxu0 0.0
    %640 = vmatprep.subr.mxu0 0.0
    %641 = vmatpush1.msra.mxu0 0.0
    %642 = vmatprep.subr.mxu0 0.0
    %643 = vmatpush1.msra.mxu0 0.0
    %644 = vmatprep.subr.mxu0 0.0
    %645 = vmatpush1.msra.mxu0 0.0
    %646 = vmatprep.subr.mxu0 0.0
    %647 = vmatpush1.msra.mxu0 0.0
    %648 = vmatprep.subr.mxu0 0.0
    %649 = vmatpush1.msra.mxu0 0.0
    %650 = vmatprep.subr.mxu0 0.0
    %651 = vmatpush1.msra.mxu0 0.0
    %652 = vmatprep.subr.mxu0 0.0
    %653 = vmatpush1.msra.mxu0 0.0
    %654 = vmatprep.subr.mxu0 0.0
    %655 = vmatpush1.msra.mxu0 0.0
    %656 = vmatprep.mubr.f32.mxu0 0.0
    %v657 = vand.u32 %v187, 4294901760
    %658 = vmatmul.mubr.f32.gmra.mrb[0].mxu0 %v657
    %v659 = vpop.f32.mrb[0].mxu0
    %v660 = vadd.f32 %v562, %v659
    %v661 = vpop.f32.mrb[0].mxu0
    %662 = vdwg.mxu0
    %663 = vmatprep.subr.mxu0 0.0
    %v664 = vand.u32 %v177, 4294901760
    %665 = vmatpush1.msra.mxu0 %v664
    %666 = vmatprep.subr.mxu0 0.0
    %v667 = vand.u32 %v178, 4294901760
    %668 = vmatpush1.msra.mxu0 %v667
    %669 = vmatprep.subr.mxu0 0.0
    %v670 = vand.u32 %v179, 4294901760
    %671 = vmatpush1.msra.mxu0 %v670
    %672 = vmatprep.subr.mxu0 0.0
    %v673 = vand.u32 %v180, 4294901760
    %674 = vmatpush1.msra.mxu0 %v673
    %675 = vmatprep.subr.mxu0 0.0
    %v676 = vand.u32 %v181, 4294901760
    %677 = vmatpush1.msra.mxu0 %v676
    %678 = vmatprep.subr.mxu0 0.0
    %v679 = vand.u32 %v182, 4294901760
    %680 = vmatpush1.msra.mxu0 %v679
    %681 = vmatprep.subr.mxu0 0.0
    %v682 = vand.u32 %v183, 4294901760
    %683 = vmatpush1.msra.mxu0 %v682
    %684 = vmatprep.subr.mxu0 0.0
    %v685 = vand.u32 %v184, 4294901760
    %686 = vmatpush1.msra.mxu0 %v685
    %687 = vmatprep.subr.mxu0 0.0
    %v688 = vand.u32 %v191, 4294901760
    %689 = vmatpush1.msra.mxu0 %v688
    %690 = vmatprep.subr.mxu0 0.0
    %691 = vmatpush1.msra.mxu0 0.0
    %692 = vmatprep.subr.mxu0 0.0
    %693 = vmatpush1.msra.mxu0 0.0
    %694 = vmatprep.subr.mxu0 0.0
    %695 = vmatpush1.msra.mxu0 0.0
    %696 = vmatprep.subr.mxu0 0.0
    %697 = vmatpush1.msra.mxu0 0.0
    %698 = vmatprep.subr.mxu0 0.0
    %699 = vmatpush1.msra.mxu0 0.0
    %700 = vmatprep.subr.mxu0 0.0
    %701 = vmatpush1.msra.mxu0 0.0
    %702 = vmatprep.subr.mxu0 0.0
    %703 = vmatpush1.msra.mxu0 0.0
    %704 = vmatprep.subr.mxu0 0.0
    %705 = vmatpush1.msra.mxu0 0.0
    %706 = vmatprep.subr.mxu0 0.0
    %707 = vmatpush1.msra.mxu0 0.0
    %708 = vmatprep.subr.mxu0 0.0
    %709 = vmatpush1.msra.mxu0 0.0
    %710 = vmatprep.subr.mxu0 0.0
    %711 = vmatpush1.msra.mxu0 0.0
    %712 = vmatprep.subr.mxu0 0.0
    %713 = vmatpush1.msra.mxu0 0.0
    %714 = vmatprep.subr.mxu0 0.0
    %715 = vmatpush1.msra.mxu0 0.0
    %716 = vmatprep.subr.mxu0 0.0
    %717 = vmatpush1.msra.mxu0 0.0
    %718 = vmatprep.subr.mxu0 0.0
    %719 = vmatpush1.msra.mxu0 0.0
    %720 = vmatprep.subr.mxu0 0.0
    %721 = vmatpush1.msra.mxu0 0.0
    %722 = vmatprep.subr.mxu0 0.0
    %723 = vmatpush1.msra.mxu0 0.0
    %724 = vmatprep.subr.mxu0 0.0
    %725 = vmatpush1.msra.mxu0 0.0
    %726 = vmatprep.subr.mxu0 0.0
    %727 = vmatpush1.msra.mxu0 0.0
    %728 = vmatprep.subr.mxu0 0.0
    %729 = vmatpush1.msra.mxu0 0.0
    %730 = vmatprep.subr.mxu0 0.0
    %731 = vmatpush1.msra.mxu0 0.0
    %732 = vmatprep.subr.mxu0 0.0
    %733 = vmatpush1.msra.mxu0 0.0
    %734 = vmatprep.subr.mxu0 0.0
    %735 = vmatpush1.msra.mxu0 0.0
    %736 = vmatprep.mubr.f32.mxu0 0.0
    %v737 = vand.u32 %v187, 4294901760
    %738 = vmatmul.mubr.f32.gmra.mrb[0].mxu0 %v737
    %v739 = vpop.f32.mrb[0].mxu0
    %v740 = vadd.f32 %v660, %v739
    %v741 = vpop.f32.mrb[0].mxu0
    %742 = vdwg.mxu0
    %v743 = vrcp.pop %v740
    %745 = vrot.lane.b32.xlu0 %v743, 124
    %v746 = vpop.permute.xlu0 %745
    %v748 = vmul.f32 %v740, %v746
    %vm749 = vcmask 31744
    %750 = vst.msk [vmem:[%s1] sm:$0xff] %vm749, %v748
    // Predicated region
    $region10: #{integral.1} parent=1 // pred_check
      _
    $region11: #{integral.1} parent=1 // pred_check_branch
      %752 = sbr.rel (0) target = $region13
    $region12: #{integral.1} parent=1 // pred_region
      _
    $region13: #{integral.1} parent=1 // pred_fallthru
      _
    // Predicated region
    $region14: #{integral.1} parent=1 // pred_check
      _
    $region15: #{integral.1} parent=1 // pred_check_branch
      %754 = sbr.rel (0) target = $region17
    $region16: #{integral.1} parent=1 // pred_region
      _
    $region17: #{integral.1} parent=1 // pred_fallthru
      _
    %755 = vsyncpa [#allocation3], 1

</llo_original>
